<compile_context>
chip_gen: v7x
topology: tpu7x:2x2x1
jax: 0.10.0
libtpu: 0.0.40
codegen_flags: <defaults>
</compile_context>

<pallas_src>
import functools

import jax
import jax.numpy as jnp
from jax import lax
from jax.experimental import pallas as pl
from jax.experimental.pallas import tpu as pltpu

ALPHA = 0.7       # module hyper-parameter (no learned weights in this module)
SMOOTH = 1.0


def _cdiv(a, b):
    return (a + b - 1) // b


def _pow2_floor(v):
    p = 1
    while p * 2 <= v:
        p *= 2
    return p


def _tensorcores_per_chip():
    """2 on v7x (2 TensorCores/chip), 1 on v5e/v6e (and unknown chips)."""
    try:
        kind = jax.devices()[0].device_kind.lower()
    except Exception:
        return 1
    return 2 if "v7" in kind else 1


def _fold_lanes(v, n_chunks):
    """Fold a (rows, n_chunks*128) value to (rows, 128) by tree-summing 128-lane chunks."""
    if n_chunks == 1:
        return v
    parts = [v[:, k * 128:(k + 1) * 128] for k in range(n_chunks)]
    while len(parts) > 1:
        nxt = [parts[i] + parts[i + 1] for i in range(0, len(parts) - 1, 2)]
        if len(parts) % 2:
            nxt.append(parts[-1])
        parts = nxt
    return parts[0]


def _seg_loss_kernel(x_ref, t_ref, acc_ref, *, C, CP, F, chunk_fold, TB, S,
                     t_per_split, any_tail):
    h = pl.program_id(0)          # spatial split half (core-parallel on v7x)
    s = pl.program_id(2)          # spatial tile within the half (arbitrary)

    @pl.when(s == 0)
    def _():
        acc_ref[...] = jnp.zeros_like(acc_ref)

    W = 128 * chunk_fold          # sub-chunk lane width (power-of-two * 128)
    n_chunks = F // chunk_fold
    base = (h * t_per_split + s) * TB   # first voxel index covered by this tile

    def process_tile(mask_lanes):
        def chunk(j, carry):
            tps_a, p_a, oh_a, ce_a = carry
            off = j * W
            if not isinstance(off, int):
                off = pl.multiple_of(off, W)
            x = x_ref[0, :, pl.ds(off, W)].astype(jnp.float32)   # (C, W) logits
            t = t_ref[0, :, pl.ds(off, W)].astype(jnp.int32)     # (1, W) labels

            # softmax over the channel (sublane) axis
            m = jnp.max(x, axis=0, keepdims=True)                # (1, W)
            e = jnp.exp(x - m)                                   # (C, W)  EUP
            z = jnp.sum(e, axis=0, keepdims=True)                # (1, W)
            inv = pl.reciprocal(z, approx=False)  # exact keeps rtol=1e-4 vs ref
            p = e * inv                                          # probabilities
            lse = jnp.log(z) + m                                 # logsumexp (1, W)

            # one-hot mask kept as bool, reused directly in selects
            cls = lax.broadcasted_iota(jnp.int32, (C, W), 0)
            ohm = cls == t                                       # (C, W) bool
            if mask_lanes:
                # Ragged tail: kill invalid lanes with selects (never multiply
                # by a mask -- padded OOB lanes may contain Inf/NaN).
                lane = lax.broadcasted_iota(jnp.int32, (1, W), 1)
                valid = (lane + (base + off)) < S                # (1, W) bool
                ohm = jnp.logical_and(ohm, valid)
                p = jnp.where(valid, p, 0.0)

            tps_part = jnp.where(ohm, p, 0.0)                    # p at target class
            oh_part = jnp.where(ohm, 1.0, 0.0)                   # class counts
            ce_part = jnp.where(ohm, lse - x, 0.0)               # -log softmax @ target

            return (tps_a + _fold_lanes(tps_part, chunk_fold),
                    p_a + _fold_lanes(p, chunk_fold),
                    oh_a + _fold_lanes(oh_part, chunk_fold),
                    ce_a + _fold_lanes(ce_part, chunk_fold))

        zero = jnp.zeros((C, 128), jnp.float32)
        init = (zero, zero, zero, zero)
        if n_chunks == 1:
            tps_a, p_a, oh_a, ce_a = chunk(0, init)
        else:
            tps_a, p_a, oh_a, ce_a = lax.fori_loop(0, n_chunks, chunk, init)

        # Single RMW per section per grid step; every section starts on an
        # 8-sublane boundary (CP = round_up(C, 8)).
        acc_ref[0, 0, 0:C, :] += tps_a
        acc_ref[0, 0, CP:CP + C, :] += p_a
        acc_ref[0, 0, 2 * CP:2 * CP + C, :] += oh_a
        acc_ref[0, 0, 3 * CP:3 * CP + C, :] += ce_a

    if not any_tail:
        # No ragged tail anywhere: single unmasked path, zero per-voxel mask cost.
        process_tile(mask_lanes=False)
    else:
        @pl.when(base + TB <= S)          # interior tile: no masking
        def _():
            process_tile(mask_lanes=False)

        @pl.when(jnp.logical_and(base < S, base + TB > S))   # straddling tile
        def _():
            process_tile(mask_lanes=True)
        # tiles with base >= S (clamped OOB tail) skip compute entirely


def segmentation_loss(logits, targets, alpha=ALPHA, smooth=SMOOTH,
                      max_fold=512, nsplit=None):
    N, C = logits.shape[0], logits.shape[1]
    S = 1
    for d in logits.shape[2:]:
        S *= d
    # TODO(synk): volumes with S < 128 (fewer voxels than one lane tile) are not
    # handled by this lane-tiled kernel; realistic 3-D volumes satisfy S >= 128.

    # Native dtypes: no extra HBM pass, the kernel upcasts in VMEM.
    x = logits.reshape(N, C, S)
    t = targets.reshape(N, 1, S)

    x_isz = jnp.dtype(logits.dtype).itemsize
    t_isz = jnp.dtype(targets.dtype).itemsize

    # --- spatial block sizing: dtype- and pipeline-aware VMEM budget ----------
    bytes_per_fold = 128 * (C * x_isz + t_isz)        # one 128-lane column, 1 buffer
    in_budget = 20 * 1024 * 1024                      # double-buffered input target
    max_f_vmem = max(1, in_budget // (2 * bytes_per_fold))
    F = max(1, min(int(max_fold), S // 128, max_f_vmem))

    # Sub-chunk width: keep each (C, W) f32 intermediate around ~4 vregs so the
    # per-chunk live set stays well inside the 64-vreg file (no spills).
    chunk_fold = _pow2_floor(max(1, min(8, 32 // max(1, C))))
    chunk_fold = _pow2_floor(max(1, min(chunk_fold, F)))
    F = max(chunk_fold, (F // chunk_fold) * chunk_fold)
    TB = 128 * F
    T = _cdiv(S, TB)                                  # total spatial tiles

    # 2-way spatial split only where there is a second TensorCore to feed (v7x).
    if nsplit is None:
        nsplit = 2 if (_tensorcores_per_chip() >= 2 and T >= 2) else 1
    nsplit = max(1, min(int(nsplit), T))
    t_per_split = _cdiv(T, nsplit)
    clamp_tail = nsplit * t_per_split > T             # static: OOB tail tiles exist
    any_tail = (nsplit * t_per_split * TB) != S       # any ragged / clamped tile

    CP = ((C + 7) // 8) * 8                           # 8-sublane aligned sections
    R = 4 * CP                                        # tps | psum | counts | ce

    # Explicit scoped-VMEM limit matching the chosen tile (inputs x2 for double
    # buffering + accumulator, plus headroom); <= 48 MiB so it is safe on v7x's
    # 64 MiB physical VMEM and well under v5e/v6e's 128 MiB.
    vmem_need = 2 * bytes_per_fold * F + 2 * R * 128 * 4
    vmem_limit = int(min(48 << 20, max(32 << 20, vmem_need + (8 << 20))))

    def _in_map(h, n, s):
        b = h * t_per_split + s
        if clamp_tail:                    # static: clamp fully-OOB tail tiles
            b = jnp.minimum(b, T - 1)     # (their compute is skipped in-kernel)
        return (n, 0, b)

    kernel = functools.partial(
        _seg_loss_kernel, C=C, CP=CP, F=F, chunk_fold=chunk_fold, TB=TB, S=S,
        t_per_split=t_per_split, any_tail=any_tail)

    def _call(dim_sems):
        return pl.pallas_call(
            kernel,
            out_shape=jax.ShapeDtypeStruct((nsplit, N, R, 128), jnp.float32),
            grid_spec=pltpu.PrefetchScalarGridSpec(
                num_scalar_prefetch=0,
                grid=(nsplit, N, t_per_split),
                in_specs=[
                    pl.BlockSpec((1, C, TB), _in_map),
                    pl.BlockSpec((1, 1, TB), _in_map),
                ],
                out_specs=pl.BlockSpec((1, 1, R, 128),
                                       lambda h, n, s: (h, n, 0, 0)),
            ),
            compiler_params=pltpu.CompilerParams(
                dimension_semantics=dim_sems,
                vmem_limit_bytes=vmem_limit),
        )(x, t)

    use_core_parallel = (nsplit == 2 and _tensorcores_per_chip() >= 2
                         and hasattr(pltpu, "CORE_PARALLEL"))
    if use_core_parallel:
        try:
            acc = _call((pltpu.CORE_PARALLEL, "parallel", "arbitrary"))
        except Exception:
            # Conservative fallback if core-parallel lowering is unavailable.
            acc = _call(("parallel", "parallel", "arbitrary"))
    else:
        acc = _call(("parallel", "parallel", "arbitrary"))

    # Tiny final reduction / formula in plain JAX.
    acc = acc.sum(axis=0)                          # combine split halves -> (N, R, 128)
    tps = acc[:, 0:C, :].sum(-1)                   # (N, C)
    psum = acc[:, CP:CP + C, :].sum(-1)            # sum(softmax)
    tsum = acc[:, 2 * CP:2 * CP + C, :].sum(-1)    # class counts
    ce_sum = acc[:, 3 * CP:3 * CP + C, :].sum()    # total cross-entropy

    beta = 2.0 - alpha
    fps = (psum - tps) * alpha
    fns = (tsum - tps) * beta
    tv = (2.0 * tps + smooth) / (2.0 * tps + fps + fns + smooth)
    tv = tv.mean(axis=0)                           # mean over batch -> (C,)
    dice = 1.0 - tv[1:].mean()                     # skip background channel
    ce = ce_sum / (N * S)                          # CrossEntropyLoss 'mean'
    return dice + ce


def _reference(logits, targets, alpha=ALPHA, smooth=SMOOTH):
    """Pure-JAX reference matching the PyTorch module semantics."""
    C = logits.shape[1]
    p = jax.nn.softmax(logits, axis=1)
    oh = jax.nn.one_hot(targets, C, axis=1, dtype=jnp.float32)
    dims = tuple(range(2, logits.ndim))
    tps = jnp.sum(p * oh, dims)
    fps = jnp.sum(p * (1.0 - oh), dims) * alpha
    fns = jnp.sum((1.0 - p) * oh, dims) * (2.0 - alpha)
    loss = (2.0 * tps + smooth) / (2.0 * tps + fps + fns + smooth)
    loss = loss.mean(axis=0)
    dice = 1.0 - loss[1:].mean()
    logp = jax.nn.log_softmax(logits, axis=1)
    ce = -jnp.mean(jnp.sum(logp * oh, axis=1))
    return dice + ce


if __name__ == "__main__":
    key = jax.random.PRNGKey(0)

    # Small configs exercising the main code paths:
    #   (2,4, 4, 8, 8)            S=256   single tile, single chunk, no tail
    #   (2,4,10,16,32)            S=5120  one tile, fori_loop over 5 sub-chunks
    #   (2,4, 9,16,24)            S=3456  multi-tile with a ragged straddling tile
    #   (2,4, 9,16,24) forced     2-way split halves + clamped OOB tail tile
    cases = [
        ((2, 4, 4, 8, 8), {}),
        ((2, 4, 10, 16, 32), {}),
        ((2, 4, 9, 16, 24), {}),
        ((2, 4, 9, 16, 24), dict(max_fold=4, nsplit=2)),
    ]
    for i, ((N, C, D, H, W), kw) in enumerate(cases):
        k1, k2 = jax.random.split(jax.random.fold_in(key, i))
        logits = jax.random.normal(k1, (N, C, D, H, W), jnp.float32)
        targets = jax.random.randint(k2, (N, D, H, W), 0, C, dtype=jnp.int32)

        out = jax.block_until_ready(segmentation_loss(logits, targets, **kw))
        ref = _reference(logits, targets)
        assert jnp.allclose(out, ref, rtol=1e-4, atol=1e-5), (i, out, ref)

    print("KERNEL_OK")
</pallas_src>

<mosaic_0001>
module attributes {stable_mosaic.version = 11 : i64} {
  func.func @_seg_loss_kernel(%arg0: i32, %arg1: i32, %arg2: i32, %arg3: memref<1x4x256xf32, #tpu.memory_space<vmem>>, %arg4: memref<1x1x256xi32, #tpu.memory_space<vmem>>, %arg5: memref<1x1x32x128xf32, #tpu.memory_space<vmem>>) attributes {dimension_semantics = [#tpu.dimension_semantics<parallel>, #tpu.dimension_semantics<parallel>, #tpu.dimension_semantics<arbitrary>], iteration_bounds = array<i64: 1, 2, 1>, scalar_prefetch = 0 : i64, scratch_operands = 0 : i64, tpu.core_type = #tpu.core_type<tc>, window_params = [{transform_indices = @transform_0, window_bounds = array<i64: 1, 4, 256>}, {transform_indices = @transform_1, window_bounds = array<i64: 1, 1, 256>}, {transform_indices = @transform_2, window_bounds = array<i64: 1, 1, 32, 128>}]} {
    %c0_i32 = arith.constant 0 : i32
    %0 = arith.cmpi eq, %arg2, %c0_i32 : i32
    %1 = arith.extui %0 : i1 to i32
    %c0_i32_0 = arith.constant 0 : i32
    %2 = arith.cmpi ne, %1, %c0_i32_0 : i32
    scf.if %2 {
      %cst_41 = arith.constant 0.000000e+00 : f32
      %72 = vector.broadcast %cst_41 : f32 to vector<1x1x32x128xf32>
      %c0_42 = arith.constant 0 : index
      %c0_43 = arith.constant 0 : index
      %c0_44 = arith.constant 0 : index
      %c0_45 = arith.constant 0 : index
      %73 = vector.load %arg5[%c0_42, %c0_43, %c0_44, %c0_45] : memref<1x1x32x128xf32, #tpu.memory_space<vmem>>, vector<1x1x32x128xf32>
      tpu.vector_store %arg5[%c0_42, %c0_43, %c0_44, %c0_45], %72 {strides = array<i32>} : memref<1x1x32x128xf32, #tpu.memory_space<vmem>>, vector<1x1x32x128xf32>,
    } else {
    }
    %cst = arith.constant 0.000000e+00 : f32
    %3 = vector.broadcast %cst : f32 to vector<4x128xf32>
    %c0 = arith.constant 0 : index
    %c0_1 = arith.constant 0 : index
    %c0_2 = arith.constant 0 : index
    %4 = vector.load %arg3[%c0, %c0_1, %c0_2] : memref<1x4x256xf32, #tpu.memory_space<vmem>>, vector<1x4x256xf32>
    %5 = vector.shape_cast %4 : vector<1x4x256xf32> to vector<4x256xf32>
    %c0_3 = arith.constant 0 : index
    %c0_4 = arith.constant 0 : index
    %c0_5 = arith.constant 0 : index
    %6 = vector.load %arg4[%c0_3, %c0_4, %c0_5] : memref<1x1x256xi32, #tpu.memory_space<vmem>>, vector<1x1x256xi32>
    %7 = vector.shape_cast %6 : vector<1x1x256xi32> to vector<1x256xi32>
    %cst_6 = arith.constant dense<0xFF800000> : vector<256xf32>
    %8 = vector.multi_reduction <maximumf>, %5, %cst_6 [0] : vector<4x256xf32> to vector<256xf32>
    %9 = vector.shape_cast %8 : vector<256xf32> to vector<1x256xf32>
    %10 = vector.broadcast %9 : vector<1x256xf32> to vector<4x256xf32>
    %11 = arith.subf %5, %10 : vector<4x256xf32>
    %12 = math.exp %11 : vector<4x256xf32>
    %cst_7 = arith.constant dense<0.000000e+00> : vector<256xf32>
    %13 = vector.multi_reduction <add>, %12, %cst_7 [0] : vector<4x256xf32> to vector<256xf32>
    %14 = vector.shape_cast %13 : vector<256xf32> to vector<1x256xf32>
    %15 = tpu.reciprocal %14 : vector<1x256xf32> -> vector<1x256xf32>
    %16 = vector.broadcast %15 : vector<1x256xf32> to vector<4x256xf32>
    %17 = arith.mulf %12, %16 : vector<4x256xf32>
    %18 = math.log %14 : vector<1x256xf32>
    %19 = arith.addf %18, %9 : vector<1x256xf32>
    %20 = tpu.iota {dimensions = array<i32: 0>} : vector<4x256xi32>
    %21 = vector.broadcast %7 : vector<1x256xi32> to vector<4x256xi32>
    %22 = arith.cmpi eq, %20, %21 : vector<4x256xi32>
    %cst_8 = arith.constant 0.000000e+00 : f32
    %23 = vector.broadcast %cst_8 : f32 to vector<4x256xf32>
    %24 = arith.select %22, %17, %23 : vector<4x256xi1>, vector<4x256xf32>
    %cst_9 = arith.constant 1.000000e+00 : f32
    %cst_10 = arith.constant 0.000000e+00 : f32
    %25 = vector.broadcast %cst_9 : f32 to vector<4x256xf32>
    %26 = vector.broadcast %cst_10 : f32 to vector<4x256xf32>
    %27 = arith.select %22, %25, %26 : vector<4x256xi1>, vector<4x256xf32>
    %28 = vector.broadcast %19 : vector<1x256xf32> to vector<4x256xf32>
    %29 = arith.subf %28, %5 : vector<4x256xf32>
    %cst_11 = arith.constant 0.000000e+00 : f32
    %30 = vector.broadcast %cst_11 : f32 to vector<4x256xf32>
    %31 = arith.select %22, %29, %30 : vector<4x256xi1>, vector<4x256xf32>
    %32 = vector.extract_strided_slice %24 {offsets = [0, 0], sizes = [4, 128], strides = [1, 1]} : vector<4x256xf32> to vector<4x128xf32>
    %33 = vector.extract_strided_slice %24 {offsets = [0, 128], sizes = [4, 128], strides = [1, 1]} : vector<4x256xf32> to vector<4x128xf32>
    %34 = arith.addf %32, %33 : vector<4x128xf32>
    %35 = arith.addf %3, %34 : vector<4x128xf32>
    %36 = vector.extract_strided_slice %17 {offsets = [0, 0], sizes = [4, 128], strides = [1, 1]} : vector<4x256xf32> to vector<4x128xf32>
    %37 = vector.extract_strided_slice %17 {offsets = [0, 128], sizes = [4, 128], strides = [1, 1]} : vector<4x256xf32> to vector<4x128xf32>
    %38 = arith.addf %36, %37 : vector<4x128xf32>
    %39 = arith.addf %3, %38 : vector<4x128xf32>
    %40 = vector.extract_strided_slice %27 {offsets = [0, 0], sizes = [4, 128], strides = [1, 1]} : vector<4x256xf32> to vector<4x128xf32>
    %41 = vector.extract_strided_slice %27 {offsets = [0, 128], sizes = [4, 128], strides = [1, 1]} : vector<4x256xf32> to vector<4x128xf32>
    %42 = arith.addf %40, %41 : vector<4x128xf32>
    %43 = arith.addf %3, %42 : vector<4x128xf32>
    %44 = vector.extract_strided_slice %31 {offsets = [0, 0], sizes = [4, 128], strides = [1, 1]} : vector<4x256xf32> to vector<4x128xf32>
    %45 = vector.extract_strided_slice %31 {offsets = [0, 128], sizes = [4, 128], strides = [1, 1]} : vector<4x256xf32> to vector<4x128xf32>
    %46 = arith.addf %44, %45 : vector<4x128xf32>
    %47 = arith.addf %3, %46 : vector<4x128xf32>
    %c0_12 = arith.constant 0 : index
    %c0_13 = arith.constant 0 : index
    %c0_14 = arith.constant 0 : index
    %c0_15 = arith.constant 0 : index
    %48 = vector.load %arg5[%c0_12, %c0_13, %c0_14, %c0_15] : memref<1x1x32x128xf32, #tpu.memory_space<vmem>>, vector<1x1x4x128xf32>
    %49 = vector.shape_cast %48 : vector<1x1x4x128xf32> to vector<4x128xf32>
    %50 = arith.addf %49, %35 : vector<4x128xf32>
    %c0_16 = arith.constant 0 : index
    %c0_17 = arith.constant 0 : index
    %c0_18 = arith.constant 0 : index
    %c0_19 = arith.constant 0 : index
    %51 = vector.load %arg5[%c0_16, %c0_17, %c0_18, %c0_19] : memref<1x1x32x128xf32, #tpu.memory_space<vmem>>, vector<1x1x4x128xf32>
    %52 = vector.shape_cast %51 : vector<1x1x4x128xf32> to vector<4x128xf32>
    %53 = vector.shape_cast %50 : vector<4x128xf32> to vector<1x1x4x128xf32>
    tpu.vector_store %arg5[%c0_16, %c0_17, %c0_18, %c0_19], %53 {strides = array<i32>} : memref<1x1x32x128xf32, #tpu.memory_space<vmem>>, vector<1x1x4x128xf32>,
    %c0_20 = arith.constant 0 : index
    %c0_21 = arith.constant 0 : index
    %c8 = arith.constant 8 : index
    %c0_22 = arith.constant 0 : index
    %54 = vector.load %arg5[%c0_20, %c0_21, %c8, %c0_22] : memref<1x1x32x128xf32, #tpu.memory_space<vmem>>, vector<1x1x4x128xf32>
    %55 = vector.shape_cast %54 : vector<1x1x4x128xf32> to vector<4x128xf32>
    %56 = arith.addf %55, %39 : vector<4x128xf32>
    %c0_23 = arith.constant 0 : index
    %c0_24 = arith.constant 0 : index
    %c8_25 = arith.constant 8 : index
    %c0_26 = arith.constant 0 : index
    %57 = vector.load %arg5[%c0_23, %c0_24, %c8_25, %c0_26] : memref<1x1x32x128xf32, #tpu.memory_space<vmem>>, vector<1x1x4x128xf32>
    %58 = vector.shape_cast %57 : vector<1x1x4x128xf32> to vector<4x128xf32>
    %59 = vector.shape_cast %56 : vector<4x128xf32> to vector<1x1x4x128xf32>
    tpu.vector_store %arg5[%c0_23, %c0_24, %c8_25, %c0_26], %59 {strides = array<i32>} : memref<1x1x32x128xf32, #tpu.memory_space<vmem>>, vector<1x1x4x128xf32>,
    %c0_27 = arith.constant 0 : index
    %c0_28 = arith.constant 0 : index
    %c16 = arith.constant 16 : index
    %c0_29 = arith.constant 0 : index
    %60 = vector.load %arg5[%c0_27, %c0_28, %c16, %c0_29] : memref<1x1x32x128xf32, #tpu.memory_space<vmem>>, vector<1x1x4x128xf32>
    %61 = vector.shape_cast %60 : vector<1x1x4x128xf32> to vector<4x128xf32>
    %62 = arith.addf %61, %43 : vector<4x128xf32>
    %c0_30 = arith.constant 0 : index
    %c0_31 = arith.constant 0 : index
    %c16_32 = arith.constant 16 : index
    %c0_33 = arith.constant 0 : index
    %63 = vector.load %arg5[%c0_30, %c0_31, %c16_32, %c0_33] : memref<1x1x32x128xf32, #tpu.memory_space<vmem>>, vector<1x1x4x128xf32>
    %64 = vector.shape_cast %63 : vector<1x1x4x128xf32> to vector<4x128xf32>
    %65 = vector.shape_cast %62 : vector<4x128xf32> to vector<1x1x4x128xf32>
    tpu.vector_store %arg5[%c0_30, %c0_31, %c16_32, %c0_33], %65 {strides = array<i32>} : memref<1x1x32x128xf32, #tpu.memory_space<vmem>>, vector<1x1x4x128xf32>,
    %c0_34 = arith.constant 0 : index
    %c0_35 = arith.constant 0 : index
    %c24 = arith.constant 24 : index
    %c0_36 = arith.constant 0 : index
    %66 = vector.load %arg5[%c0_34, %c0_35, %c24, %c0_36] : memref<1x1x32x128xf32, #tpu.memory_space<vmem>>, vector<1x1x4x128xf32>
    %67 = vector.shape_cast %66 : vector<1x1x4x128xf32> to vector<4x128xf32>
    %68 = arith.addf %67, %47 : vector<4x128xf32>
    %c0_37 = arith.constant 0 : index
    %c0_38 = arith.constant 0 : index
    %c24_39 = arith.constant 24 : index
    %c0_40 = arith.constant 0 : index
    %69 = vector.load %arg5[%c0_37, %c0_38, %c24_39, %c0_40] : memref<1x1x32x128xf32, #tpu.memory_space<vmem>>, vector<1x1x4x128xf32>
    %70 = vector.shape_cast %69 : vector<1x1x4x128xf32> to vector<4x128xf32>
    %71 = vector.shape_cast %68 : vector<4x128xf32> to vector<1x1x4x128xf32>
    tpu.vector_store %arg5[%c0_37, %c0_38, %c24_39, %c0_40], %71 {strides = array<i32>} : memref<1x1x32x128xf32, #tpu.memory_space<vmem>>, vector<1x1x4x128xf32>,
    return
  }
  func.func @transform_0(%arg0: i32, %arg1: i32, %arg2: i32) -> (i32, i32, i32) {
    %c1_i32 = arith.constant 1 : i32
    %0 = arith.muli %arg0, %c1_i32 : i32
    %1 = arith.addi %0, %arg2 : i32
    %c0_i32 = arith.constant 0 : i32
    %c0_i32_0 = arith.constant 0 : i32
    return %arg1, %c0_i32, %1 : i32, i32, i32
  }
  func.func @transform_1(%arg0: i32, %arg1: i32, %arg2: i32) -> (i32, i32, i32) {
    %c1_i32 = arith.constant 1 : i32
    %0 = arith.muli %arg0, %c1_i32 : i32
    %1 = arith.addi %0, %arg2 : i32
    %c0_i32 = arith.constant 0 : i32
    %c0_i32_0 = arith.constant 0 : i32
    return %arg1, %c0_i32, %1 : i32, i32, i32
  }
  func.func @transform_2(%arg0: i32, %arg1: i32, %arg2: i32) -> (i32, i32, i32, i32) {
    %c0_i32 = arith.constant 0 : i32
    %c0_i32_0 = arith.constant 0 : i32
    %c0_i32_1 = arith.constant 0 : i32
    return %arg0, %arg1, %c0_i32, %c0_i32_0 : i32, i32, i32, i32
  }
}

</mosaic_0001>

<llo_original>
// kernel: tpu_custom_call.1
$region0: #{tpu_custom_call.1}
  #allocation0 [shape = 'u32[]', space=smem, size = 0x4, offset = 0x4, fixed_abs, tag = 'smem constant byte address 0x4 - core index']
  #allocation1 [shape = 'u32[144,128]{1,0:T(1,128)}', space=vmem, size = 0x12000, scoped, tag = 'internal scratch']
  %s0 = inlined_call_operand.hbm [shape: f32[2,4,256], index: 0, kind: input, shape index: {}]
  %s1 = inlined_call_operand.hbm [shape: s32[2,1,256], index: 1, kind: input, shape index: {}]
  %s2 = inlined_call_operand.hbm [shape: f32[1,2,32,128], index: 2, kind: output, shape index: {}]
  %s3 = sld [smem:[#allocation0]]
  $region53: #{tpu_custom_call.1} parent=0
    _
  %s5 = ssub.s32 1, %s3
  %s6 = scalar_select 0, %s5, %s3
  $region1: #{tpu_custom_call.1} parent=0
    #allocation2 [shape = 'u8[8192]{0}', space=vmem, size = 0x2000, scoped, tag = 'input window, operand 0']
    #allocation3 [shape = 's32[2]{0}', space=sflag, size = 0x8, scoped, tag = 'scoped memory for tpu_custom_call.1']
    #allocation4 [shape = 's32[2]{0}', space=sflag, size = 0x8, scoped, tag = 'scoped memory for tpu_custom_call.1']
    #allocation5 [shape = 'u8[2048]{0}', space=vmem, size = 0x800, scoped, tag = 'input window, operand 1']
    #allocation6 [shape = 's32[2]{0}', space=sflag, size = 0x8, scoped, tag = 'scoped memory for tpu_custom_call.1']
    #allocation7 [shape = 'u8[32768]{0}', space=vmem, size = 0x8000, scoped, tag = 'output window, operand 0']
    %7 = vsyncpa [#allocation3], 0
    %s8 = scalar_lea.sflag [#allocation3], 1
    %9 = vsyncpa %s8, 0
    %10 = vsyncpa [#allocation6], 0
    %s11 = scalar_lea.sflag [#allocation6], 1
    %12 = vsyncpa %s11, 0
    %13 = vsyncpa [#allocation4], 0
    %s14 = scalar_lea.sflag [#allocation4], 1
    %15 = vsyncpa %s14, 0
    loop: start=0, step=1, limit=4
    $region2: #{tpu_custom_call.1} parent=1 // loop_pre_header
      _
    $region3: #{tpu_custom_call.1} parent=1 // loop_header
      %s17 = sphi 0, %s21
      %p18 = scmp.ge.s32.totalorder %s17, 4
      %s24 = sphi 0, %s43
      %s25 = sphi 0, %s39
      %s26 = sphi 0, %s35
      %s27 = sphi 0, %s24
      %s28 = sphi 0, %s25
      %s29 = sphi 0, %s26
      %s30 = sphi 0, %s27
      %s31 = sphi 0, %s28
      %s32 = sphi 0, %s29
      %s50 = sphi 0, %s52
      %s53 = sphi 0, %s50
      %s54 = sphi 0, %s53
      %s70 = sphi 0, %s54
      %s80 = sphi 0, %s82
      %s83 = sphi 0, %s80
      %s84 = sphi 0, %s83
      %s100 = sphi 0, %s84
      %s108 = sphi 0, %s110
      %s111 = sphi 0, %s108
      %s112 = sphi 0, %s111
      %s128 = sphi 0, %s112
    $region4: #{tpu_custom_call.1} parent=1 // loop_header_branch
      %20 = sbr.rel (%p18) target = $region8
    $region5: #{tpu_custom_call.1} parent=1 // loop_body
      %s22 = ssub.s32 %s17, 1
      %s23 = ssub.s32 %s17, 2
      %s33 = sadd.s32 1, %s26
      %p34 = scmp.ge.s32.totalorder %s33, 1
      %s35 = scalar_select %p34, 0, %s33
      %s36 = sadd.s32 1, %s25
      %s37 = scalar_select %p34, %s36, %s25
      %p38 = scmp.ge.s32.totalorder %s37, 2
      %s39 = scalar_select %p38, 0, %s37
      %s40 = sadd.s32 1, %s24
      %s41 = scalar_select %p38, %s40, %s24
      %p42 = scmp.ge.s32.totalorder %s41, 1
      %s43 = scalar_select %p42, 0, %s41
      %s44 = sadd.s32 %s24, %s26
      %s45 = sadd.s32 %s43, %s35
      %s46 = ssub.s32 %s25, %s39
      %s47 = ssub.s32 %s44, %s45
      %s48 = sor.u32 %s46, %s47
      %p49 = scmp.eq.s32.totalorder %s48, 0
      %s51 = sadd.s32 %s50, 1
      %s52 = scalar_select %p49, %s50, %s51
      %p55 = pneg %p49
      %p56 = scmp.eq.s32.totalorder %s17, 1
      %p57 = por %p55, %p56
      %p58 = scmp.ne.s32.totalorder %s50, %s53
      %p59 = scmp.eq.s32.totalorder %s17, 0
      %p60 = por %p58, %p59
      %p61 = scmp.ne.s32.totalorder %s50, %s53
      %p62 = scmp.eq.s32.totalorder %s22, 1
      %p63 = por %p61, %p62
      %p64 = scmp.ne.s32.totalorder %s53, %s54
      %p65 = scmp.eq.s32.totalorder %s22, 0
      %p66 = por %p64, %p65
      %p67 = scmp.ne.s32.totalorder %s53, %s54
      %p68 = scmp.eq.s32.totalorder %s23, 1
      %p69 = por %p67, %p68
      %p71 = scmp.ne.s32.totalorder %s54, %s70
      %p72 = scmp.eq.s32.totalorder %s23, 0
      %p73 = por %p71, %p72
      %s74 = sadd.s32 %s24, %s26
      %s75 = sadd.s32 %s43, %s35
      %s76 = ssub.s32 %s25, %s39
      %s77 = ssub.s32 %s74, %s75
      %s78 = sor.u32 %s76, %s77
      %p79 = scmp.eq.s32.totalorder %s78, 0
      %s81 = sadd.s32 %s80, 1
      %s82 = scalar_select %p79, %s80, %s81
      %p85 = pneg %p79
      %p86 = scmp.eq.s32.totalorder %s17, 1
      %p87 = por %p85, %p86
      %p88 = scmp.ne.s32.totalorder %s80, %s83
      %p89 = scmp.eq.s32.totalorder %s17, 0
      %p90 = por %p88, %p89
      %p91 = scmp.ne.s32.totalorder %s80, %s83
      %p92 = scmp.eq.s32.totalorder %s22, 1
      %p93 = por %p91, %p92
      %p94 = scmp.ne.s32.totalorder %s83, %s84
      %p95 = scmp.eq.s32.totalorder %s22, 0
      %p96 = por %p94, %p95
      %p97 = scmp.ne.s32.totalorder %s83, %s84
      %p98 = scmp.eq.s32.totalorder %s23, 1
      %p99 = por %p97, %p98
      %p101 = scmp.ne.s32.totalorder %s84, %s100
      %p102 = scmp.eq.s32.totalorder %s23, 0
      %p103 = por %p101, %p102
      %s104 = ssub.s32 %s24, %s43
      %s105 = ssub.s32 %s25, %s39
      %s106 = sor.u32 %s104, %s105
      %p107 = scmp.eq.s32.totalorder %s106, 0
      %s109 = sadd.s32 %s108, 1
      %s110 = scalar_select %p107, %s108, %s109
      %p113 = pneg %p107
      %p114 = scmp.eq.s32.totalorder %s17, 1
      %p115 = por %p113, %p114
      %p116 = scmp.ne.s32.totalorder %s108, %s111
      %p117 = scmp.eq.s32.totalorder %s17, 0
      %p118 = por %p116, %p117
      %p119 = scmp.ne.s32.totalorder %s108, %s111
      %p120 = scmp.eq.s32.totalorder %s22, 1
      %p121 = por %p119, %p120
      %p122 = scmp.ne.s32.totalorder %s111, %s112
      %p123 = scmp.eq.s32.totalorder %s22, 0
      %p124 = por %p122, %p123
      %p125 = scmp.ne.s32.totalorder %s111, %s112
      %p126 = scmp.eq.s32.totalorder %s23, 1
      %p127 = por %p125, %p126
      %p129 = scmp.ne.s32.totalorder %s112, %s128
      %p130 = scmp.eq.s32.totalorder %s23, 0
      %p131 = por %p129, %p130
      %p132 = scmp.le.s32.totalorder 1, %s17
      %p133 = scmp.lt.s32.totalorder %s17, 3
      %p134 = pnand %p132, %p133
      %p135 = pneg %p134
      // Predicated region
      $region9: #{tpu_custom_call.1} parent=5 // pred_check
        _
      $region10: #{tpu_custom_call.1} parent=5 // pred_check_branch
        %137 = sbr.rel (%p134) target = $region12
      $region11: #{tpu_custom_call.1} parent=5 // pred_region
        %s138 = ssub.s32 %s17, 1
      $region12: #{tpu_custom_call.1} parent=5 // pred_fallthru
        _
      %p139 = scmp.lt.s32.totalorder %s17, 2
      // Predicated region
      $region13: #{tpu_custom_call.1} parent=5 // pred_check
        %p140 = pneg %p139
      $region14: #{tpu_custom_call.1} parent=5 // pred_check_branch
        %142 = sbr.rel (%p140) target = $region16
      $region15: #{tpu_custom_call.1} parent=5 // pred_region
        // Predicated region
        $region17: #{tpu_custom_call.1} parent=15 // pred_check
          %p143 = pneg %p60
        $region18: #{tpu_custom_call.1} parent=15 // pred_check_branch
          %145 = sbr.rel (%p143) target = $region20
        $region19: #{tpu_custom_call.1} parent=15 // pred_region
          %s146 = sand.u32 %s50, 1
          %s147 = scalar_lea.sflag [#allocation3], %s146
          %s148 = sand.u32 %s50, 1
          %s149 = smul.addr %s148, 8
          %s150 = scalar_lea.vmem [#allocation2], %s149
          %s151 = sadd.s32 %s24, %s26
          %s152 = smul.u32 2, %s151
          %s154 = ssub.s32 128, 128
          %155 = vsyncadd %s147, %s154
          %s156 = smul.addr %s25, 2
          %s157 = sadd.s32 %s152, %s156
          %s158 = smul.addr %s157, 64
          %s159 = scalar_lea.hbm %s0, %s158
          %s161 = sshll.u32 %s150, 4
          %s162 = int_to_ptr.vmem [resolvable:$true] %s161
          %164 = dma.hbm_to_vmem [thread:$0]  %s159, 128, %s162, %s147
        $region20: #{tpu_custom_call.1} parent=15 // pred_fallthru
          _
        // Predicated region
        $region21: #{tpu_custom_call.1} parent=15 // pred_check
          %p165 = pneg %p90
        $region22: #{tpu_custom_call.1} parent=15 // pred_check_branch
          %167 = sbr.rel (%p165) target = $region24
        $region23: #{tpu_custom_call.1} parent=15 // pred_region
          %s168 = sand.u32 %s80, 1
          %s169 = scalar_lea.sflag [#allocation6], %s168
          %s170 = sand.u32 %s80, 1
          %s171 = smul.addr %s170, 2
          %s172 = scalar_lea.vmem [#allocation5], %s171
          %s173 = sadd.s32 %s24, %s26
          %s174 = smul.u32 2, %s173
          %s176 = ssub.s32 32, 32
          %177 = vsyncadd %s169, %s176
          %s178 = smul.addr %s25, 2
          %s179 = sadd.s32 %s174, %s178
          %s180 = smul.addr %s179, 16
          %s181 = scalar_lea.hbm %s1, %s180
          %s183 = sshll.u32 %s172, 4
          %s184 = int_to_ptr.vmem [resolvable:$true] %s183
          %186 = dma.hbm_to_vmem [thread:$0]  %s181, 32, %s184, %s169
        $region24: #{tpu_custom_call.1} parent=15 // pred_fallthru
          _
      $region16: #{tpu_custom_call.1} parent=5 // pred_fallthru
        _
      %p187 = scmp.le.s32.totalorder 1, %s17
      %p188 = scmp.lt.s32.totalorder %s17, 3
      %p189 = pnand %p187, %p188
      %p190 = pneg %p189
      // Predicated region
      $region25: #{tpu_custom_call.1} parent=5 // pred_check
        _
      $region26: #{tpu_custom_call.1} parent=5 // pred_check_branch
        %192 = sbr.rel (%p189) target = $region28
      $region27: #{tpu_custom_call.1} parent=5 // pred_region
        %s193 = ssub.s32 %s17, 1
        %s194 = sand.u32 %s53, 1
        %s195 = scalar_lea.sflag [#allocation3], %s194
        %s196 = sand.u32 %s53, 1
        %s197 = smul.addr %s196, 8
        %s198 = scalar_lea.vmem [#allocation2], %s197
        // Predicated region
        $region29: #{tpu_custom_call.1} parent=27 // pred_check
          %p199 = pneg %p66
        $region30: #{tpu_custom_call.1} parent=27 // pred_check_branch
          %201 = sbr.rel (%p199) target = $region32
        $region31: #{tpu_custom_call.1} parent=27 // pred_region
          %202 = dma.done %s195, 128
        $region32: #{tpu_custom_call.1} parent=27 // pred_fallthru
          _
        %s203 = sand.u32 %s83, 1
        %s204 = scalar_lea.sflag [#allocation6], %s203
        %s205 = sand.u32 %s83, 1
        %s206 = smul.addr %s205, 2
        %s207 = scalar_lea.vmem [#allocation5], %s206
        // Predicated region
        $region33: #{tpu_custom_call.1} parent=27 // pred_check
          %p208 = pneg %p96
        $region34: #{tpu_custom_call.1} parent=27 // pred_check_branch
          %210 = sbr.rel (%p208) target = $region36
        $region35: #{tpu_custom_call.1} parent=27 // pred_region
          %211 = dma.done %s204, 32
        $region36: #{tpu_custom_call.1} parent=27 // pred_fallthru
          _
        %s212 = sand.u32 %s53, 1
        %s213 = scalar_lea.sflag [#allocation3], %s212
        %s214 = sand.u32 %s53, 1
        %s215 = smul.addr %s214, 8
        %s216 = scalar_lea.vmem [#allocation2], %s215
        %p217 = pneg %p66
        %p218 = pneg %p63
        %s219 = sand.u32 %s83, 1
        %s220 = scalar_lea.sflag [#allocation6], %s219
        %s221 = sand.u32 %s83, 1
        %s222 = smul.addr %s221, 2
        %s223 = scalar_lea.vmem [#allocation5], %s222
        %p224 = pneg %p96
        %p225 = pneg %p93
        %p226 = pneg %p124
        %p227 = pneg %p121
        %s228 = sand.u32 %s111, 1
        %s229 = scalar_lea.sflag [#allocation4], %s228
        %s230 = sand.u32 %s111, 1
        %s231 = smul.addr %s230, 32
        %s232 = scalar_lea.vmem [#allocation7], %s231
        %s233 = sadd.s32 %s27, %s29
        %s234 = smul.u32 2, %s233
        %s235 = sadd.s32 %s27, %s29
        %s236 = smul.u32 2, %s235
        %p237 = scmp.eq.s32.totalorder %s29, 0
        // Predicated region
        $region37: #{tpu_custom_call.1} parent=27 // pred_check
          %p238 = pneg %p237
        $region38: #{tpu_custom_call.1} parent=27 // pred_check_branch
          %240 = sbr.rel (%p238) target = $region40
        $region39: #{tpu_custom_call.1} parent=27 // pred_region
          %241 = vst [vmem:[%s232] sm:$0xff] 0.0
          %242 = vst [vmem:[%s232 + $0x8] sm:$0xff] 0.0
          %243 = vst [vmem:[%s232 + $0x10] sm:$0xff] 0.0
          %244 = vst [vmem:[%s232 + $0x18] sm:$0xff] 0.0
        $region40: #{tpu_custom_call.1} parent=27 // pred_fallthru
          _
        %v245 = vld [vmem:[%s198] sm:$0xff]
        %v246 = vld [vmem:[%s207] sm:$0x3]
        %v248 = vcombine.high %v245, %v245
        %vm250 = vcmask 1043456
        %v251 = vsel %vm250, %v245, -inf
        %v252 = vrot.slane %v251, 4
        %v253 = vmax.f32 %v251, %v252
        %v254 = vrot.slane %v253, 2
        %v255 = vmax.f32 %v253, %v254
        %v256 = vrot.slane %v255, 1
        %v257 = vmax.f32 %v255, %v256
        %v258 = vsel %vm250, %v248, -inf
        %v259 = vrot.slane %v258, 4
        %v260 = vmax.f32 %v258, %v259
        %v261 = vrot.slane %v260, 2
        %v262 = vmax.f32 %v260, %v261
        %v263 = vrot.slane %v262, 1
        %v264 = vmax.f32 %v262, %v263
        %v267 = vcombine.low %v257, %v264
        %v269 = vsub.f32 %v245, %v267
        %v270 = vmul.f32 %v269, 1.442695
        %v271 = vpow.pop %v270
        %v273 = vcombine.high %v271, %v271
        %v275 = vsel %vm250, %v271, 0.0
        %v276 = vrot.slane %v275, 4
        %v277 = vadd.f32 %v275, %v276
        %v278 = vrot.slane %v277, 2
        %v279 = vadd.f32 %v277, %v278
        %v280 = vrot.slane %v279, 1
        %v281 = vadd.f32 %v279, %v280
        %v282 = vsel %vm250, %v273, 0.0
        %v283 = vrot.slane %v282, 4
        %v284 = vadd.f32 %v282, %v283
        %v285 = vrot.slane %v284, 2
        %v286 = vadd.f32 %v284, %v285
        %v287 = vrot.slane %v286, 1
        %v288 = vadd.f32 %v286, %v287
        %v289 = vrcp.pop %v281
        %v290 = vrcp.pop %v288
        %v293 = vcombine.low %v289, %v290
        %v295 = vmul.f32 %v271, %v293
        %v296 = vlog2.pop %v281
        %v297 = vmul.f32 %v296, 0.6931472
        %v298 = vlog2.pop %v288
        %v299 = vmul.f32 %v298, 0.6931472
        %v300 = vadd.f32 %v297, %v257
        %v301 = vadd.f32 %v299, %v264
        %v302 = vlaneseq
        %v303 = vshrl.u32 %v302, 7
        %v304 = vlaneseq
        %v305 = vshrl.u32 %v304, 7
        %v306 = vsub.s32 0, %v305
        %v307 = vrot.slane %v246, %v306
        %v308 = vlaneseq
        %v309 = vshrl.u32 %v308, 7
        %v310 = vsub.s32 1, %v309
        %v311 = vrot.slane %v246, %v310
        %vm312 = vcmp.eq.s32.totalorder %v303, %v307
        %vm313 = vcmp.eq.s32.totalorder %v303, %v311
        %v315 = vcombine.high %v295, %v295
        %v317 = vsel %vm312, %v295, 0.0
        %v318 = vsel %vm313, %v315, 0.0
        %v319 = vsel %vm312, 1.0, 0.0
        %v320 = vsel %vm313, 1.0, 0.0
        %v321 = vsub.f32 %v300, %v245
        %v322 = vsub.f32 %v301, %v248
        %v323 = vsel %vm312, %v321, 0.0
        %v324 = vsel %vm313, %v322, 0.0
        %v325 = vadd.f32 %v317, %v318
        %v326 = vadd.f32 %v325, 0.0
        %v327 = vrot.slane %v295, 4
        %v329 = vadd.f32 %v295, %v327
        %v330 = vadd.f32 %v329, 0.0
        %v331 = vadd.f32 %v319, %v320
        %v332 = vadd.f32 %v331, 0.0
        %v333 = vadd.f32 %v323, %v324
        %v334 = vadd.f32 %v333, 0.0
        %v335 = vld [vmem:[%s232] sm:$0xf]
        %v336 = vadd.f32 %v335, %v326
        %337 = vst [vmem:[%s232] sm:$0xf] %v336
        %v338 = vld [vmem:[%s232 + $0x8] sm:$0xf]
        %v339 = vadd.f32 %v338, %v330
        %340 = vst [vmem:[%s232 + $0x8] sm:$0xf] %v339
        %v341 = vld [vmem:[%s232 + $0x10] sm:$0xf]
        %v342 = vadd.f32 %v341, %v332
        %343 = vst [vmem:[%s232 + $0x10] sm:$0xf] %v342
        %v344 = vld [vmem:[%s232 + $0x18] sm:$0xf]
        %v345 = vadd.f32 %v344, %v334
        %346 = vst [vmem:[%s232 + $0x18] sm:$0xf] %v345
        %s347 = sand.u32 %s111, 1
        %s348 = scalar_lea.sflag [#allocation4], %s347
        %s349 = sand.u32 %s111, 1
        %s350 = smul.addr %s349, 32
        %s351 = scalar_lea.vmem [#allocation7], %s350
        // Predicated region
        $region41: #{tpu_custom_call.1} parent=27 // pred_check
          %p352 = pneg %p121
        $region42: #{tpu_custom_call.1} parent=27 // pred_check_branch
          %354 = sbr.rel (%p352) target = $region44
        $region43: #{tpu_custom_call.1} parent=27 // pred_region
          %s356 = ssub.s32 512, 512
          %357 = vsyncadd %s348, %s356
          %s358 = smul.addr %s28, 4
          %s359 = smul.addr %s27, 8
          %s360 = sadd.s32 %s358, %s359
          %s361 = smul.addr %s360, 128
          %s362 = scalar_lea.hbm %s2, %s361
          %s363 = sshll.u32 %s351, 4
          %s364 = int_to_ptr.vmem [resolvable:$true] %s363
          %369 = dma.vmem_to_hbm [thread:$0]  %s364, 512, %s362, %s348, 128, 128, 8
        $region44: #{tpu_custom_call.1} parent=27 // pred_fallthru
          _
      $region28: #{tpu_custom_call.1} parent=5 // pred_fallthru
        _
      %p370 = scmp.le.s32.totalorder 2, %s17
      // Predicated region
      $region45: #{tpu_custom_call.1} parent=5 // pred_check
        %p371 = pneg %p370
      $region46: #{tpu_custom_call.1} parent=5 // pred_check_branch
        %373 = sbr.rel (%p371) target = $region48
      $region47: #{tpu_custom_call.1} parent=5 // pred_region
        %s374 = ssub.s32 %s17, 2
        // Predicated region
        $region49: #{tpu_custom_call.1} parent=47 // pred_check
          %p375 = pneg %p127
        $region50: #{tpu_custom_call.1} parent=47 // pred_check_branch
          %377 = sbr.rel (%p375) target = $region52
        $region51: #{tpu_custom_call.1} parent=47 // pred_region
          %s378 = sand.u32 %s112, 1
          %s379 = scalar_lea.sflag [#allocation4], %s378
          %s380 = sand.u32 %s112, 1
          %s381 = smul.addr %s380, 32
          %s382 = scalar_lea.vmem [#allocation7], %s381
          %383 = dma.done %s379, 512
        $region52: #{tpu_custom_call.1} parent=47 // pred_fallthru
          _
      $region48: #{tpu_custom_call.1} parent=5 // pred_fallthru
        _
    $region6: #{tpu_custom_call.1} parent=1 // loop_footer
      %s21 = sadd.s32 1, %s17
    $region7: #{tpu_custom_call.1} parent=1 // loop_footer_branch
      %16 = sbr.rel target = $region3
    $region8: #{tpu_custom_call.1} parent=1 // loop_exit
      _
    %384 = vsyncpa [#allocation3], 1
    %s385 = scalar_lea.sflag [#allocation3], 1
    %386 = vsyncpa %s385, 1
    %387 = vsyncpa [#allocation6], 1
    %s388 = scalar_lea.sflag [#allocation6], 1
    %389 = vsyncpa %s388, 1
    %390 = vsyncpa [#allocation4], 1
    %s391 = scalar_lea.sflag [#allocation4], 1
    %392 = vsyncpa %s391, 1

</llo_original>
